<compile_context>
chip_gen: v7x
topology: tpu7x:2x2x1
jax: 0.10.0
libtpu: 0.0.40
codegen_flags: <defaults>
</compile_context>

<pallas_src>
import numpy as np
import jax
import jax.numpy as jnp
from jax.experimental import pallas as pl
from jax.experimental.pallas import tpu as pltpu


_LANE = 128
_MAX_TILE_BYTES = 1 << 20  # 1 MiB/tile; x4 (in+out, double-buffered) = 4 MiB VMEM


def _copy_kernel(w_ref, o_ref):
    # forward(): return self.weight  ->  identity copy of the current tile.
    o_ref[...] = w_ref[...]


def _row_tile(rows: int, itemsize: int) -> int:
    """Largest row tile that divides `rows`, is a multiple of 8, fits budget."""
    max_rows = max(8, _MAX_TILE_BYTES // (_LANE * itemsize))
    if rows <= max_rows:
        return rows  # single full block (equal-to-full-dim blocks are legal)
    t = (max_rows // 8) * 8
    while t >= 8:
        if rows % t == 0:
            return t
        t -= 8
    # No aligned divisor (e.g. prime row count): fall back to one full block.
    return rows


def learnable_spectral_filters_forward(weight: jax.Array) -> jax.Array:
    """Pallas equivalent of LearnableSpectralFilters.forward().

    NOTE: the zero-cost implementation is simply `return weight`; this keeps
    an explicit (tuned) pallas_call shell as required.
    """
    d_in, d_out = weight.shape
    total = d_in * d_out
    itemsize = jnp.dtype(weight.dtype).itemsize

    if total % _LANE == 0:
        # Lane-dense path: view the weight as a (rows, 128) slab.
        rows = total // _LANE
        tile = _row_tile(rows, itemsize)
        slab = weight.reshape(rows, _LANE)
        out = pl.pallas_call(
            _copy_kernel,
            out_shape=jax.ShapeDtypeStruct((rows, _LANE), weight.dtype),
            grid=(rows // tile,),
            in_specs=[pl.BlockSpec((tile, _LANE), lambda i: (i, 0))],
            out_specs=pl.BlockSpec((tile, _LANE), lambda i: (i, 0)),
            input_output_aliases={0: 0},
            compiler_params=pltpu.CompilerParams(
                dimension_semantics=("parallel",)),
        )(slab)
        return out.reshape(d_in, d_out)

    # Fallback (element count not a multiple of 128): single full-array block,
    # still aliased so no extra HBM output allocation is made.
    return pl.pallas_call(
        _copy_kernel,
        out_shape=jax.ShapeDtypeStruct((d_in, d_out), weight.dtype),
        grid=(1,),
        in_specs=[pl.BlockSpec((d_in, d_out), lambda i: (0, 0))],
        out_specs=pl.BlockSpec((d_in, d_out), lambda i: (0, 0)),
        input_output_aliases={0: 0},
        compiler_params=pltpu.CompilerParams(
            dimension_semantics=("arbitrary",)),
    )(weight)


# Donating entry point: the caller's weight buffer is reused for the output,
# so the identity "forward" allocates nothing and moves (at most) 2x the
# array bytes through the pipelined copy.
learnable_spectral_filters_forward_donating = jax.jit(
    learnable_spectral_filters_forward, donate_argnums=(0,))


def init_learnable_spectral_filters(key, d_in: int, d_out: int,
                                    use_hankel_L: bool = False,
                                    dtype=jnp.float32):
    """Stand-in for nn.Parameter(torch.randn(d_in, d_out)).

    use_hankel_L is unused, exactly as in the reference module.
    """
    return jax.random.normal(key, (d_in, d_out), dtype=dtype)


if __name__ == "__main__":
    key = jax.random.PRNGKey(0)
    d_in, d_out = 16, 32  # small shapes consistent with the module

    weight = init_learnable_spectral_filters(key, d_in, d_out,
                                             use_hankel_L=False)
    # Host snapshot for the correctness check (the device buffer is donated).
    expected = np.asarray(weight)

    out = learnable_spectral_filters_forward_donating(weight)
    out = jax.block_until_ready(out)

    # Forward must return the weight exactly (shape, dtype, values).
    assert out.shape == (d_in, d_out)
    assert out.dtype == jnp.float32
    assert np.array_equal(np.asarray(out), expected)

    print("KERNEL_OK")
</pallas_src>

<mosaic_0001>
module attributes {stable_mosaic.version = 11 : i64} {
  func.func @_copy_kernel(%arg0: i32, %arg1: memref<4x128xf32, #tpu.memory_space<vmem>>, %arg2: memref<4x128xf32, #tpu.memory_space<vmem>>) attributes {dimension_semantics = [#tpu.dimension_semantics<parallel>], iteration_bounds = array<i64: 1>, scalar_prefetch = 0 : i64, scratch_operands = 0 : i64, tpu.core_type = #tpu.core_type<tc>, window_params = [{transform_indices = @transform_0, window_bounds = array<i64: 4, 128>}, {transform_indices = @transform_1, window_bounds = array<i64: 4, 128>}]} {
    %c0 = arith.constant 0 : index
    %c0_0 = arith.constant 0 : index
    %0 = vector.load %arg1[%c0, %c0_0] : memref<4x128xf32, #tpu.memory_space<vmem>>, vector<4x128xf32>
    %c0_1 = arith.constant 0 : index
    %c0_2 = arith.constant 0 : index
    %1 = vector.load %arg2[%c0_1, %c0_2] : memref<4x128xf32, #tpu.memory_space<vmem>>, vector<4x128xf32>
    tpu.vector_store %arg2[%c0_1, %c0_2], %0 {strides = array<i32>} : memref<4x128xf32, #tpu.memory_space<vmem>>, vector<4x128xf32>,
    return
  }
  func.func @transform_0(%arg0: i32) -> (i32, i32) {
    %c0_i32 = arith.constant 0 : i32
    %c0_i32_0 = arith.constant 0 : i32
    return %arg0, %c0_i32 : i32, i32
  }
  func.func @transform_1(%arg0: i32) -> (i32, i32) {
    %c0_i32 = arith.constant 0 : i32
    %c0_i32_0 = arith.constant 0 : i32
    return %arg0, %c0_i32 : i32, i32
  }
}

</mosaic_0001>

<llo_original>
// kernel: learnable_spectral_filters_forward.1
$region0: #{learnable_spectral_filters_forward.1}
  #allocation0 [shape = 'u32[]', space=smem, size = 0x4, offset = 0x4, fixed_abs, tag = 'smem constant byte address 0x4 - core index']
  #allocation1 [shape = 'u32[144,128]{1,0:T(1,128)}', space=vmem, size = 0x12000, scoped, tag = 'internal scratch']
  %s0 = inlined_call_operand.vmem [shape: f32[4,128], index: 0, kind: input, shape index: {}, may-alias: {0,1}]
  %s1 = inlined_call_operand.vmem [shape: f32[4,128], index: 1, kind: output, shape index: {}, may-alias: {0,1}]
  %s2 = sld [smem:[#allocation0]]
  $region14: #{learnable_spectral_filters_forward.1} parent=0
    _
  %s4 = ssub.s32 1, %s2
  %s5 = scalar_select 0, %s4, %s2
  // Predicated region
  $region2: #{learnable_spectral_filters_forward.1} parent=0 // pred_check
    _
  $region3: #{learnable_spectral_filters_forward.1} parent=0 // pred_check_branch
    %7 = sbr.rel (0) target = $region5
  $region4: #{learnable_spectral_filters_forward.1} parent=0 // pred_region
    _
  $region5: #{learnable_spectral_filters_forward.1} parent=0 // pred_fallthru
    _
  %v8 = vld [vmem:[%s0] sm:$0xf]
  %9 = vst [vmem:[%s1] sm:$0xf] %v8
  // Predicated region
  $region6: #{learnable_spectral_filters_forward.1} parent=0 // pred_check
    _
  $region7: #{learnable_spectral_filters_forward.1} parent=0 // pred_check_branch
    %11 = sbr.rel (0) target = $region9
  $region8: #{learnable_spectral_filters_forward.1} parent=0 // pred_region
    _
  $region9: #{learnable_spectral_filters_forward.1} parent=0 // pred_fallthru
    _
  // Predicated region
  $region10: #{learnable_spectral_filters_forward.1} parent=0 // pred_check
    _
  $region11: #{learnable_spectral_filters_forward.1} parent=0 // pred_check_branch
    %13 = sbr.rel (0) target = $region13
  $region12: #{learnable_spectral_filters_forward.1} parent=0 // pred_region
    _
  $region13: #{learnable_spectral_filters_forward.1} parent=0 // pred_fallthru
    _

</llo_original>
